<compile_context>
chip_gen: v6e
topology: v6e:2x2x1
jax: 0.10.0
libtpu: 0.0.40
codegen_flags: <defaults>
</compile_context>

<pallas_src>
import math
import numpy as np
import jax
import jax.numpy as jnp
from jax.experimental import pallas as pl
from jax.experimental.pallas import tpu as pltpu

# ---- problem sizes (small, consistent with the module) ----
B = 2            # batch
S = 8            # sequence length
D = 32           # n_units (embedding dim)
VOCAB = 128      # vocabulary size (lane-aligned)
SCALE = math.sqrt(D)


def word_embedding_kernel(ids_ref, table_ref, o_ref):
    # ids_ref:   (N, 1) int32   -- flattened (B*S) token ids
    # table_ref: (VOCAB, D) f32 -- embedding table
    # o_ref:     (N, D) f32     -- scaled embeddings
    n = ids_ref.shape[0]
    vocab = table_ref.shape[0]

    ids = ids_ref[...]                                              # (N, 1)
    cols = jax.lax.broadcasted_iota(jnp.int32, (n, vocab), 1)       # (N, V)
    onehot = jnp.where(cols == ids, 1.0, 0.0).astype(jnp.float32)   # (N, V) exact one-hot

    # Gather-as-matmul on the MXU: exact row selection (0/1 weights), then scale.
    emb = jnp.dot(onehot, table_ref[...], preferred_element_type=jnp.float32)  # (N, D)
    o_ref[...] = (emb * SCALE).astype(o_ref.dtype)


def word_embedding(ids, table):
    """ids: (B, S) int32 ; table: (VOCAB, D) f32 -> (B, S, D) f32 = table[ids] * sqrt(D)."""
    b, s = ids.shape
    n = b * s
    d = table.shape[1]
    out = pl.pallas_call(
        word_embedding_kernel,
        out_shape=jax.ShapeDtypeStruct((n, d), jnp.float32),
        in_specs=[
            pl.BlockSpec(memory_space=pltpu.MemorySpace.VMEM),  # ids (full array)
            pl.BlockSpec(memory_space=pltpu.MemorySpace.VMEM),  # table (full array)
        ],
        out_specs=pl.BlockSpec(memory_space=pltpu.MemorySpace.VMEM),
    )(ids.reshape(n, 1).astype(jnp.int32), table)
    return out.reshape(b, s, d)


def reference_word_embedding(ids, table):
    return jnp.take(table, ids, axis=0) * SCALE


if __name__ == "__main__":
    key = jax.random.PRNGKey(0)
    k_ids, k_tab = jax.random.split(key, 2)

    ids = jax.random.randint(k_ids, (B, S), 0, VOCAB, dtype=jnp.int32)
    table = jax.random.normal(k_tab, (VOCAB, D), jnp.float32)

    out = jax.block_until_ready(word_embedding(ids, table))
    ref = jax.block_until_ready(reference_word_embedding(ids, table))

    assert out.shape == (B, S, D)
    np.testing.assert_allclose(np.asarray(out), np.asarray(ref), rtol=1e-6, atol=1e-6)

    print("KERNEL_OK")
</pallas_src>

<mosaic_0001>
module attributes {stable_mosaic.version = 11 : i64} {
  func.func @word_embedding_kernel(%arg0: memref<16x1xi32, #tpu.memory_space<vmem>>, %arg1: memref<128x32xf32, #tpu.memory_space<vmem>>, %arg2: memref<16x32xf32, #tpu.memory_space<vmem>>) attributes {dimension_semantics = [], scalar_prefetch = 0 : i64, scratch_operands = 0 : i64, tpu.core_type = #tpu.core_type<tc>} {
    %c0 = arith.constant 0 : index
    %c0_0 = arith.constant 0 : index
    %0 = vector.load %arg0[%c0, %c0_0] : memref<16x1xi32, #tpu.memory_space<vmem>>, vector<16x1xi32>
    %1 = tpu.iota {dimensions = array<i32: 1>} : vector<16x128xi32>
    %2 = vector.broadcast %0 : vector<16x1xi32> to vector<16x128xi32>
    %3 = arith.cmpi eq, %1, %2 : vector<16x128xi32>
    %cst = arith.constant 1.000000e+00 : f32
    %cst_1 = arith.constant 0.000000e+00 : f32
    %4 = vector.broadcast %cst : f32 to vector<16x128xf32>
    %5 = vector.broadcast %cst_1 : f32 to vector<16x128xf32>
    %6 = arith.select %3, %4, %5 : vector<16x128xi1>, vector<16x128xf32>
    %c0_2 = arith.constant 0 : index
    %c0_3 = arith.constant 0 : index
    %7 = vector.load %arg1[%c0_2, %c0_3] : memref<128x32xf32, #tpu.memory_space<vmem>>, vector<128x32xf32>
    %cst_4 = arith.constant dense<0.000000e+00> : vector<16x32xf32>
    %8 = tpu.matmul %6, %7, %cst_4 {dimension_numbers = #tpu.dot_dimension_numbers<[1], [0], [0], [1], [0, 0, 1, 1], [], []>} : vector<16x128xf32>, vector<128x32xf32>, vector<16x32xf32> -> vector<16x32xf32>
    %cst_5 = arith.constant 5.65685415 : f32
    %9 = vector.broadcast %cst_5 : f32 to vector<16x32xf32>
    %10 = arith.mulf %8, %9 : vector<16x32xf32>
    %c0_6 = arith.constant 0 : index
    %c0_7 = arith.constant 0 : index
    %11 = vector.load %arg2[%c0_6, %c0_7] : memref<16x32xf32, #tpu.memory_space<vmem>>, vector<16x32xf32>
    tpu.vector_store %arg2[%c0_6, %c0_7], %10 {strides = array<i32>} : memref<16x32xf32, #tpu.memory_space<vmem>>, vector<16x32xf32>,
    return
  }
}

</mosaic_0001>

<llo_original>
// kernel: tpu_custom_call.1
$region0: #{tpu_custom_call.1}
  #allocation0 [shape = 'u32[]', space=smem, size = 0x4, offset = 0x4, fixed_abs, tag = 'smem constant byte address 0x4 - core index']
  #allocation1 [shape = 'u32[144,128]{1,0:T(1,128)}', space=vmem, size = 0x12000, scoped, tag = 'internal scratch']
  %s0 = inlined_call_operand.vmem [shape: s32[16,1], index: 0, kind: input, shape index: {}]
  %s1 = inlined_call_operand.vmem [shape: f32[128,32], index: 1, kind: input, shape index: {}]
  %s2 = inlined_call_operand.hbm [shape: f32[16,32], index: 2, kind: output, shape index: {}]
  %s3 = sld [smem:[#allocation0]]
  $region18: #{tpu_custom_call.1} parent=0
    _
  %s5 = ssub.s32 1, %s3
  %s6 = scalar_select 0, %s5, %s3
  $region1: #{tpu_custom_call.1} parent=0
    #allocation2 [shape = 'u8[8192]{0}', space=vmem, size = 0x2000, scoped, tag = 'output window, operand 0, single buffered']
    #allocation3 [shape = 's32[1]{0}', space=sflag, size = 0x4, scoped, tag = 'scoped memory for tpu_custom_call.1']
    %7 = vsyncpa [#allocation3], 0
    // Predicated region
    $region2: #{tpu_custom_call.1} parent=1 // pred_check
      _
    $region3: #{tpu_custom_call.1} parent=1 // pred_check_branch
      %9 = sbr.rel (0) target = $region5
    $region4: #{tpu_custom_call.1} parent=1 // pred_region
      _
    $region5: #{tpu_custom_call.1} parent=1 // pred_fallthru
      _
    // Predicated region
    $region6: #{tpu_custom_call.1} parent=1 // pred_check
      _
    $region7: #{tpu_custom_call.1} parent=1 // pred_check_branch
      %11 = sbr.rel (0) target = $region9
    $region8: #{tpu_custom_call.1} parent=1 // pred_region
      _
    $region9: #{tpu_custom_call.1} parent=1 // pred_fallthru
      _
    %v12 = vld [vmem:[%s0] sm:$0xff]
    %v13 = vld [vmem:[%s0 + $0x8] sm:$0xff]
    %v14 = vlaneseq
    %v15 = vand.u32 %v14, 127
    %16 = vset.pattern.permute.xlu0 0
    %17 = vperm.xlu0 %16, %v12
    %v18 = vpop.permute.xlu0 %17
    %19 = vset.pattern.permute.xlu0 0
    %20 = vperm.xlu0 %19, %v13
    %v21 = vpop.permute.xlu0 %20
    %vm22 = vcmp.eq.s32.totalorder %v15, %v18
    %vm23 = vcmp.eq.s32.totalorder %v15, %v21
    %v24 = vsel %vm22, 1.0, 0.0
    %v25 = vsel %vm23, 1.0, 0.0
    %v26 = vld [vmem:[%s1] sm:$0xff]
    %v27 = vld [vmem:[%s1 + $0x8] sm:$0xff]
    %v28 = vld [vmem:[%s1 + $0x10] sm:$0xff]
    %v29 = vld [vmem:[%s1 + $0x18] sm:$0xff]
    %v30 = vld [vmem:[%s1 + $0x20] sm:$0xff]
    %v31 = vld [vmem:[%s1 + $0x28] sm:$0xff]
    %v32 = vld [vmem:[%s1 + $0x30] sm:$0xff]
    %v33 = vld [vmem:[%s1 + $0x38] sm:$0xff]
    %v34 = vld [vmem:[%s1 + $0x40] sm:$0xff]
    %v35 = vld [vmem:[%s1 + $0x48] sm:$0xff]
    %v36 = vld [vmem:[%s1 + $0x50] sm:$0xff]
    %v37 = vld [vmem:[%s1 + $0x58] sm:$0xff]
    %v38 = vld [vmem:[%s1 + $0x60] sm:$0xff]
    %v39 = vld [vmem:[%s1 + $0x68] sm:$0xff]
    %v40 = vld [vmem:[%s1 + $0x70] sm:$0xff]
    %v41 = vld [vmem:[%s1 + $0x78] sm:$0xff]
    %42 = vmatprep.subr.mxu0 0.0
    %43 = vmatpush1.msra.mxu0 %v41
    %44 = vmatprep.subr.mxu0 0.0
    %45 = vmatpush1.msra.mxu0 %v40
    %46 = vmatprep.subr.mxu0 0.0
    %47 = vmatpush1.msra.mxu0 %v39
    %48 = vmatprep.subr.mxu0 0.0
    %49 = vmatpush1.msra.mxu0 %v38
    %50 = vmatprep.subr.mxu0 0.0
    %51 = vmatpush1.msra.mxu0 %v37
    %52 = vmatprep.subr.mxu0 0.0
    %53 = vmatpush1.msra.mxu0 %v36
    %54 = vmatprep.subr.mxu0 0.0
    %55 = vmatpush1.msra.mxu0 %v35
    %56 = vmatprep.subr.mxu0 0.0
    %57 = vmatpush1.msra.mxu0 %v34
    %58 = vmatprep.subr.mxu0 0.0
    %59 = vmatpush1.msra.mxu0 %v33
    %60 = vmatprep.subr.mxu0 0.0
    %61 = vmatpush1.msra.mxu0 %v32
    %62 = vmatprep.subr.mxu0 0.0
    %63 = vmatpush1.msra.mxu0 %v31
    %64 = vmatprep.subr.mxu0 0.0
    %65 = vmatpush1.msra.mxu0 %v30
    %66 = vmatprep.subr.mxu0 0.0
    %67 = vmatpush1.msra.mxu0 %v29
    %68 = vmatprep.subr.mxu0 0.0
    %69 = vmatpush1.msra.mxu0 %v28
    %70 = vmatprep.subr.mxu0 0.0
    %71 = vmatpush1.msra.mxu0 %v27
    %72 = vmatprep.subr.mxu0 0.0
    %73 = vmatpush1.msra.mxu0 %v26
    %74 = vmatprep.subr.mxu0 0.0
    %75 = vmatpush2.msra.mxu0 0.0
    %76 = vmatprep.subr.mxu0 0.0
    %77 = vmatpush2.msra.mxu0 0.0
    %78 = vmatprep.subr.mxu0 0.0
    %79 = vmatpush2.msra.mxu0 0.0
    %80 = vmatprep.subr.mxu0 0.0
    %81 = vmatpush2.msra.mxu0 0.0
    %82 = vmatprep.subr.mxu0 0.0
    %83 = vmatpush2.msra.mxu0 0.0
    %84 = vmatprep.subr.mxu0 0.0
    %85 = vmatpush2.msra.mxu0 0.0
    %86 = vmatprep.subr.mxu0 0.0
    %87 = vmatpush2.msra.mxu0 0.0
    %88 = vmatprep.subr.mxu0 0.0
    %89 = vmatpush2.msra.mxu0 0.0
    %90 = vmatprep.subr.mxu0 0.0
    %91 = vmatpush2.msra.mxu0 0.0
    %92 = vmatprep.subr.mxu0 0.0
    %93 = vmatpush2.msra.mxu0 0.0
    %94 = vmatprep.subr.mxu0 0.0
    %95 = vmatpush2.msra.mxu0 0.0
    %96 = vmatprep.subr.mxu0 0.0
    %97 = vmatpush2.msra.mxu0 0.0
    %98 = vmatprep.subr.mxu0 0.0
    %99 = vmatpush2.msra.mxu0 0.0
    %100 = vmatprep.subr.mxu0 0.0
    %101 = vmatpush2.msra.mxu0 0.0
    %102 = vmatprep.subr.mxu0 0.0
    %103 = vmatpush2.msra.mxu0 0.0
    %104 = vmatprep.subr.mxu0 0.0
    %105 = vmatpush2.msra.mxu0 0.0
    %106 = vmatprep.mubr.f32.mxu0 0.0
    %107 = vmatmul.mubr.f32.gmra.mxu0 %v24
    %v108 = vpop.f32.mrf.mxu0
    %v109 = vadd.f32 0.0, %v108
    %v110 = vpop.f32.mrf.mxu0
    %111 = vmatprep.mubr.f32.mxu0 0.0
    %112 = vmatmul.mubr.f32.gmra.mxu0 %v25
    %v113 = vpop.f32.mrf.mxu0
    %v114 = vadd.f32 0.0, %v113
    %v115 = vpop.f32.mrf.mxu0
    %116 = vdwg.mxu0
    %v117 = vmul.f32 %v109, 5.656854
    %v118 = vmul.f32 %v114, 5.656854
    %vm119 = vcmask 261120
    %120 = vst.msk [vmem:[#allocation2] sm:$0xff] %vm119, %v117
    %121 = vst.msk [vmem:[#allocation2 + $0x8] sm:$0xff] %vm119, %v118
    // Predicated region
    $region10: #{tpu_custom_call.1} parent=1 // pred_check
      _
    $region11: #{tpu_custom_call.1} parent=1 // pred_check_branch
      %123 = sbr.rel (0) target = $region13
    $region12: #{tpu_custom_call.1} parent=1 // pred_region
      %s125 = ssub.s32 256, 256
      %126 = vsyncadd [#allocation3], %s125
      %s127 = sshll.u32 [#allocation2], 4
      %s128 = int_to_ptr.vmem [resolvable:$true] %s127
      %133 = dma.vmem_to_hbm [thread:$0]  %s128, 256, %s2, [#allocation3], 128, 128, 8
    $region13: #{tpu_custom_call.1} parent=1 // pred_fallthru
      _
    // Predicated region
    $region14: #{tpu_custom_call.1} parent=1 // pred_check
      _
    $region15: #{tpu_custom_call.1} parent=1 // pred_check_branch
      %135 = sbr.rel (0) target = $region17
    $region16: #{tpu_custom_call.1} parent=1 // pred_region
      %136 = dma.done [#allocation3], 256
    $region17: #{tpu_custom_call.1} parent=1 // pred_fallthru
      _
    %137 = vsyncpa [#allocation3], 1

</llo_original>
